<compile_context>
chip_gen: v7x
topology: tpu7x:2x2x1
jax: 0.10.0
libtpu: 0.0.40
codegen_flags: <defaults>
</compile_context>

<pallas_src>
import jax
import jax.numpy as jnp
from jax.experimental import pallas as pl
from jax.experimental.pallas import tpu as pltpu

_LANE = 128


def _tile_transpose_kernel(x_ref, o_ref):
    # x_ref: (TB, TC, THW)  ->  o_ref: (TB, THW, TC)
    # Static unroll over the batch block: each iteration is a plain 2-D
    # (TC, THW) -> (THW, TC) transpose (clean, proven XLU lowering).
    for b in range(x_ref.shape[0]):
        o_ref[b] = x_ref[b].T


def _candidate_tiles(dim: int, align: int, cap: int):
    """Descending tile sizes: multiples of `align` dividing `dim` (<= cap),
    plus the full dim as a last resort (a full-extent block dim is always
    exempt from the (8, 128) divisibility rule)."""
    cands = []
    t = align
    top = min(dim, cap)
    while t <= top:
        if dim % t == 0:
            cands.append(t)
        t += align
    cands.sort(reverse=True)
    if dim not in cands:
        cands.append(dim)
    return cands


def _divisors_desc(n: int):
    return [d for d in range(n, 0, -1) if n % d == 0]


def _tpu_budgets():
    """Return (tile budget for double-buffered in+out tiles, scoped-VMEM cap)
    in bytes, per TPU generation."""
    try:
        kind = jax.devices()[0].device_kind.lower()
    except Exception:
        kind = ""
    if ("v5" in kind) or ("v6" in kind):
        # 128 MiB physical VMEM: exploit it, but leave headroom.
        return 64 * 1024 * 1024, 96 * 1024 * 1024
    # v7x has only 64 MiB VMEM per TensorCore (scoped default 32 MiB);
    # unknown generations get the conservative budget too.
    return 24 * 1024 * 1024, 48 * 1024 * 1024


def permute_nchw_to_nhwc(x: jax.Array) -> jax.Array:
    """Pallas equivalent of Permute(lambda x: x.permute(0, 2, 3, 1))."""
    B, C, H, W = x.shape
    HW = H * W
    itemsize = x.dtype.itemsize
    tile_budget, vmem_cap = _tpu_budgets()

    # Tiny channel counts: the output lane dim would be << 128, so nearly every
    # store lane is masked -> strictly worse than letting XLA / the consumer
    # handle the permute.  Bail out.
    if C < _LANE:
        return jnp.transpose(x, (0, 2, 3, 1))

    # Pad C up to the next multiple of 128 so writeback stores are lane-dense
    # (unmasked vst); the padding is sliced off after the kernel.
    C_pad = ((C + _LANE - 1) // _LANE) * _LANE

    # --- tile selection ------------------------------------------------------
    # Prefer TC == full (padded) C: each output row is then one contiguous,
    # unstrided run in HBM and the channel grid axis collapses.  THW is the
    # largest lane-aligned spatial tile keeping the double-buffered in+out
    # footprint (4 * tile_bytes) inside the per-generation VMEM budget.
    sel = None
    for tc in _candidate_tiles(C_pad, _LANE, C_pad):
        for thw in _candidate_tiles(HW, _LANE, 4096):
            if 4 * tc * thw * itemsize <= tile_budget:
                sel = (tc, thw)
                break
        if sel is not None:
            break
    if sel is None:
        # No legal tiling fits VMEM (e.g. huge C x HW with awkward
        # divisibility): bail to XLA rather than risk a VMEM OOM.
        return jnp.transpose(x, (0, 2, 3, 1))
    TC, THW = sel

    # Block several batch entries per grid step when tiles are small, so the
    # fixed ~0.35 us per-step overhead is amortized (capped to keep the static
    # in-kernel unroll short).
    TB = 1
    for tb in _divisors_desc(B):
        if tb <= 16 and 4 * tb * TC * THW * itemsize <= tile_budget:
            TB = tb
            break

    tile_bytes = TB * TC * THW * itemsize
    # Double-buffered in + out tiles with 2x headroom, clamped below physical
    # VMEM of the most constrained generation in use.
    vmem_limit = int(min(max(8 * tile_bytes, 16 * 1024 * 1024), vmem_cap))

    x2 = x.reshape(B, C, HW)
    if C_pad != C:
        x2 = jnp.pad(x2, ((0, 0), (0, C_pad - C), (0, 0)))

    out2 = pl.pallas_call(
        _tile_transpose_kernel,
        out_shape=jax.ShapeDtypeStruct((B, HW, C_pad), x.dtype),
        grid_spec=pltpu.PrefetchScalarGridSpec(
            num_scalar_prefetch=0,
            grid=(B // TB, C_pad // TC, HW // THW),
            in_specs=[
                pl.BlockSpec((TB, TC, THW), lambda b, ci, si: (b, ci, si)),
            ],
            out_specs=pl.BlockSpec((TB, THW, TC), lambda b, ci, si: (b, si, ci)),
        ),
        compiler_params=pltpu.CompilerParams(
            # Every tile is independent -> all axes parallel (lets v7x's two
            # TensorCores split the work; neutral on v5e/v6e).
            dimension_semantics=("parallel", "parallel", "parallel"),
            vmem_limit_bytes=vmem_limit,
        ),
        cost_estimate=pl.CostEstimate(
            flops=0,
            transcendentals=0,
            bytes_accessed=2 * B * C_pad * HW * itemsize,  # pure bandwidth op
        ),
    )(x2)

    if C_pad != C:
        out2 = out2[:, :, :C]
    return out2.reshape(B, H, W, C)


class PermutePallas:
    """Mirror of the PyTorch `Permute` module: holds a callable and applies it."""

    def __init__(self, func):
        self.func = func

    def __call__(self, x):
        return self.func(x)


if __name__ == "__main__":
    key = jax.random.PRNGKey(0)

    # Canonical small NCHW input consistent with the module's use in vrwkv7:
    # batch=2, channels=4, spatial=16x16.  C < 128 -> XLA bypass path.
    x = jax.random.normal(key, (2, 4, 16, 16), dtype=jnp.float32)
    module = PermutePallas(permute_nchw_to_nhwc)
    y = jax.block_until_ready(module(x))
    ref = jnp.transpose(x, (0, 2, 3, 1))
    assert y.shape == (2, 16, 16, 4), y.shape
    assert y.dtype == x.dtype
    assert jnp.array_equal(y, ref), "mismatch vs reference permute (C=4 case)"

    # Lane-dense Pallas path (C multiple of 128), batch-blocked (TB=2).
    x2 = jax.random.normal(jax.random.PRNGKey(1), (2, 128, 8, 16),
                           dtype=jnp.float32)
    y2 = jax.block_until_ready(permute_nchw_to_nhwc(x2))
    assert jnp.array_equal(y2, jnp.transpose(x2, (0, 2, 3, 1))), \
        "mismatch vs reference permute (C=128 case)"

    # bf16 case (packed-sublane dtype) on the Pallas path.
    x3 = jax.random.normal(jax.random.PRNGKey(2), (1, 128, 16, 16),
                           dtype=jnp.bfloat16)
    y3 = jax.block_until_ready(permute_nchw_to_nhwc(x3))
    assert jnp.array_equal(y3, jnp.transpose(x3, (0, 2, 3, 1))), \
        "mismatch vs reference permute (bf16 case)"

    # Channel-padding path (C > 128 but not a multiple of 128): pad->permute->slice.
    x4 = jax.random.normal(jax.random.PRNGKey(3), (1, 192, 8, 16),
                           dtype=jnp.float32)
    y4 = jax.block_until_ready(permute_nchw_to_nhwc(x4))
    assert jnp.array_equal(y4, jnp.transpose(x4, (0, 2, 3, 1))), \
        "mismatch vs reference permute (C=192 padded case)"

    print("KERNEL_OK")
</pallas_src>

<mosaic_0001>
module attributes {stable_mosaic.version = 11 : i64} {
  func.func @_tile_transpose_kernel(%arg0: i32, %arg1: i32, %arg2: i32, %arg3: memref<2x128x128xf32, #tpu.memory_space<vmem>>, %arg4: memref<2x128x128xf32, #tpu.memory_space<vmem>>) attributes {dimension_semantics = [#tpu.dimension_semantics<parallel>, #tpu.dimension_semantics<parallel>, #tpu.dimension_semantics<parallel>], iteration_bounds = array<i64: 1, 1, 1>, scalar_prefetch = 0 : i64, scratch_operands = 0 : i64, tpu.core_type = #tpu.core_type<tc>, window_params = [{transform_indices = @transform_0, window_bounds = array<i64: 2, 128, 128>}, {transform_indices = @transform_1, window_bounds = array<i64: 2, 128, 128>}]} {
    %c0 = arith.constant 0 : index
    %c0_0 = arith.constant 0 : index
    %c0_1 = arith.constant 0 : index
    %0 = vector.load %arg3[%c0, %c0_0, %c0_1] : memref<2x128x128xf32, #tpu.memory_space<vmem>>, vector<1x128x128xf32>
    %1 = vector.shape_cast %0 : vector<1x128x128xf32> to vector<128x128xf32>
    %2 = tpu.transpose %1, [1, 0] : vector<128x128xf32> -> vector<128x128xf32>
    %c0_2 = arith.constant 0 : index
    %c0_3 = arith.constant 0 : index
    %c0_4 = arith.constant 0 : index
    %3 = vector.load %arg4[%c0_2, %c0_3, %c0_4] : memref<2x128x128xf32, #tpu.memory_space<vmem>>, vector<1x128x128xf32>
    %4 = vector.shape_cast %3 : vector<1x128x128xf32> to vector<128x128xf32>
    %5 = vector.shape_cast %2 : vector<128x128xf32> to vector<1x128x128xf32>
    tpu.vector_store %arg4[%c0_2, %c0_3, %c0_4], %5 {strides = array<i32>} : memref<2x128x128xf32, #tpu.memory_space<vmem>>, vector<1x128x128xf32>,
    %c1 = arith.constant 1 : index
    %c0_5 = arith.constant 0 : index
    %c0_6 = arith.constant 0 : index
    %6 = vector.load %arg3[%c1, %c0_5, %c0_6] : memref<2x128x128xf32, #tpu.memory_space<vmem>>, vector<1x128x128xf32>
    %7 = vector.shape_cast %6 : vector<1x128x128xf32> to vector<128x128xf32>
    %8 = tpu.transpose %7, [1, 0] : vector<128x128xf32> -> vector<128x128xf32>
    %c1_7 = arith.constant 1 : index
    %c0_8 = arith.constant 0 : index
    %c0_9 = arith.constant 0 : index
    %9 = vector.load %arg4[%c1_7, %c0_8, %c0_9] : memref<2x128x128xf32, #tpu.memory_space<vmem>>, vector<1x128x128xf32>
    %10 = vector.shape_cast %9 : vector<1x128x128xf32> to vector<128x128xf32>
    %11 = vector.shape_cast %8 : vector<128x128xf32> to vector<1x128x128xf32>
    tpu.vector_store %arg4[%c1_7, %c0_8, %c0_9], %11 {strides = array<i32>} : memref<2x128x128xf32, #tpu.memory_space<vmem>>, vector<1x128x128xf32>,
    return
  }
  func.func @transform_0(%arg0: i32, %arg1: i32, %arg2: i32) -> (i32, i32, i32) {
    %c0_i32 = arith.constant 0 : i32
    return %arg0, %arg1, %arg2 : i32, i32, i32
  }
  func.func @transform_1(%arg0: i32, %arg1: i32, %arg2: i32) -> (i32, i32, i32) {
    %c0_i32 = arith.constant 0 : i32
    return %arg0, %arg2, %arg1 : i32, i32, i32
  }
}

</mosaic_0001>

<llo_original>
// kernel: tpu_custom_call.1
$region0: #{tpu_custom_call.1}
  #allocation0 [shape = 'u32[]', space=smem, size = 0x4, offset = 0x4, fixed_abs, tag = 'smem constant byte address 0x4 - core index']
  #allocation1 [shape = 'u32[144,128]{1,0:T(1,128)}', space=vmem, size = 0x12000, scoped, tag = 'internal scratch']
  %s0 = inlined_call_operand.hbm [shape: f32[2,128,128], index: 0, kind: input, shape index: {}]
  %s1 = inlined_call_operand.hbm [shape: f32[2,128,128], index: 1, kind: output, shape index: {}]
  %s2 = sld [smem:[#allocation0]]
  $region18: #{tpu_custom_call.1} parent=0
    _
  %s4 = ssub.s32 1, %s2
  %s5 = scalar_select 0, %s4, %s2
  $region1: #{tpu_custom_call.1} parent=0
    #allocation2 [shape = 'u8[131072]{0}', space=vmem, size = 0x20000, scoped, tag = 'input window, operand 0, single buffered']
    #allocation3 [shape = 's32[1]{0}', space=sflag, size = 0x4, scoped, tag = 'scoped memory for tpu_custom_call.1']
    #allocation4 [shape = 's32[1]{0}', space=sflag, size = 0x4, scoped, tag = 'scoped memory for tpu_custom_call.1']
    #allocation5 [shape = 'u8[131072]{0}', space=vmem, size = 0x20000, scoped, tag = 'output window, operand 0, single buffered']
    %6 = vsyncpa [#allocation3], 0
    %7 = vsyncpa [#allocation4], 0
    // Predicated region
    $region2: #{tpu_custom_call.1} parent=1 // pred_check
      _
    $region3: #{tpu_custom_call.1} parent=1 // pred_check_branch
      %9 = sbr.rel (0) target = $region5
    $region4: #{tpu_custom_call.1} parent=1 // pred_region
      %s11 = ssub.s32 4096, 4096
      %12 = vsyncadd [#allocation3], %s11
      %s13 = sshll.u32 [#allocation2], 4
      %s14 = int_to_ptr.vmem [resolvable:$true] %s13
      %19 = dma.hbm_to_vmem [thread:$0]  %s0, 4096, %s14, [#allocation3], 128, 128, 8
    $region5: #{tpu_custom_call.1} parent=1 // pred_fallthru
      _
    // Predicated region
    $region6: #{tpu_custom_call.1} parent=1 // pred_check
      _
    $region7: #{tpu_custom_call.1} parent=1 // pred_check_branch
      %21 = sbr.rel (0) target = $region9
    $region8: #{tpu_custom_call.1} parent=1 // pred_region
      %22 = dma.done [#allocation3], 4096
    $region9: #{tpu_custom_call.1} parent=1 // pred_fallthru
      _
    %v23 = vld [vmem:[#allocation2] sm:$0xff]
    %v24 = vld [vmem:[#allocation2 + $0x8] sm:$0xff]
    %v25 = vld [vmem:[#allocation2 + $0x10] sm:$0xff]
    %v26 = vld [vmem:[#allocation2 + $0x18] sm:$0xff]
    %v27 = vld [vmem:[#allocation2 + $0x20] sm:$0xff]
    %v28 = vld [vmem:[#allocation2 + $0x28] sm:$0xff]
    %v29 = vld [vmem:[#allocation2 + $0x30] sm:$0xff]
    %v30 = vld [vmem:[#allocation2 + $0x38] sm:$0xff]
    %v31 = vld [vmem:[#allocation2 + $0x40] sm:$0xff]
    %v32 = vld [vmem:[#allocation2 + $0x48] sm:$0xff]
    %v33 = vld [vmem:[#allocation2 + $0x50] sm:$0xff]
    %v34 = vld [vmem:[#allocation2 + $0x58] sm:$0xff]
    %v35 = vld [vmem:[#allocation2 + $0x60] sm:$0xff]
    %v36 = vld [vmem:[#allocation2 + $0x68] sm:$0xff]
    %v37 = vld [vmem:[#allocation2 + $0x70] sm:$0xff]
    %v38 = vld [vmem:[#allocation2 + $0x78] sm:$0xff]
    %39 = vxpose.xlu0.b32.start [1/16] %v23, 128
    %40 = vxpose.xlu0.b32.cont [2/16] %v24, 128
    %41 = vxpose.xlu0.b32.cont [3/16] %v25, 128
    %42 = vxpose.xlu0.b32.cont [4/16] %v26, 128
    %43 = vxpose.xlu0.b32.cont [5/16] %v27, 128
    %44 = vxpose.xlu0.b32.cont [6/16] %v28, 128
    %45 = vxpose.xlu0.b32.cont [7/16] %v29, 128
    %46 = vxpose.xlu0.b32.cont [8/16] %v30, 128
    %47 = vxpose.xlu0.b32.cont [9/16] %v31, 128
    %48 = vxpose.xlu0.b32.cont [10/16] %v32, 128
    %49 = vxpose.xlu0.b32.cont [11/16] %v33, 128
    %50 = vxpose.xlu0.b32.cont [12/16] %v34, 128
    %51 = vxpose.xlu0.b32.cont [13/16] %v35, 128
    %52 = vxpose.xlu0.b32.cont [14/16] %v36, 128
    %53 = vxpose.xlu0.b32.cont [15/16] %v37, 128
    %54 = vxpose.xlu0.b32.end [16/16] %v38, 128
    %v55 = vpop.trf.xlu0
    %v56 = vpop.trf.xlu0
    %v57 = vpop.trf.xlu0
    %v58 = vpop.trf.xlu0
    %v59 = vpop.trf.xlu0
    %v60 = vpop.trf.xlu0
    %v61 = vpop.trf.xlu0
    %v62 = vpop.trf.xlu0
    %v63 = vpop.trf.xlu0
    %v64 = vpop.trf.xlu0
    %v65 = vpop.trf.xlu0
    %v66 = vpop.trf.xlu0
    %v67 = vpop.trf.xlu0
    %v68 = vpop.trf.xlu0
    %v69 = vpop.trf.xlu0
    %v70 = vpop.trf.xlu0
    %71 = vst [vmem:[#allocation5] sm:$0xff] %v55
    %72 = vst [vmem:[#allocation5 + $0x8] sm:$0xff] %v56
    %73 = vst [vmem:[#allocation5 + $0x10] sm:$0xff] %v57
    %74 = vst [vmem:[#allocation5 + $0x18] sm:$0xff] %v58
    %75 = vst [vmem:[#allocation5 + $0x20] sm:$0xff] %v59
    %76 = vst [vmem:[#allocation5 + $0x28] sm:$0xff] %v60
    %77 = vst [vmem:[#allocation5 + $0x30] sm:$0xff] %v61
    %78 = vst [vmem:[#allocation5 + $0x38] sm:$0xff] %v62
    %79 = vst [vmem:[#allocation5 + $0x40] sm:$0xff] %v63
    %80 = vst [vmem:[#allocation5 + $0x48] sm:$0xff] %v64
    %81 = vst [vmem:[#allocation5 + $0x50] sm:$0xff] %v65
    %82 = vst [vmem:[#allocation5 + $0x58] sm:$0xff] %v66
    %83 = vst [vmem:[#allocation5 + $0x60] sm:$0xff] %v67
    %84 = vst [vmem:[#allocation5 + $0x68] sm:$0xff] %v68
    %85 = vst [vmem:[#allocation5 + $0x70] sm:$0xff] %v69
    %86 = vst [vmem:[#allocation5 + $0x78] sm:$0xff] %v70
    %s87 = scalar_lea.vmem [#allocation2], 128
    %v88 = vld [vmem:[%s87] sm:$0xff]
    %v89 = vld [vmem:[%s87 + $0x8] sm:$0xff]
    %v90 = vld [vmem:[%s87 + $0x10] sm:$0xff]
    %v91 = vld [vmem:[%s87 + $0x18] sm:$0xff]
    %v92 = vld [vmem:[%s87 + $0x20] sm:$0xff]
    %v93 = vld [vmem:[%s87 + $0x28] sm:$0xff]
    %v94 = vld [vmem:[%s87 + $0x30] sm:$0xff]
    %v95 = vld [vmem:[%s87 + $0x38] sm:$0xff]
    %v96 = vld [vmem:[%s87 + $0x40] sm:$0xff]
    %v97 = vld [vmem:[%s87 + $0x48] sm:$0xff]
    %v98 = vld [vmem:[%s87 + $0x50] sm:$0xff]
    %v99 = vld [vmem:[%s87 + $0x58] sm:$0xff]
    %v100 = vld [vmem:[%s87 + $0x60] sm:$0xff]
    %v101 = vld [vmem:[%s87 + $0x68] sm:$0xff]
    %v102 = vld [vmem:[%s87 + $0x70] sm:$0xff]
    %v103 = vld [vmem:[%s87 + $0x78] sm:$0xff]
    %104 = vxpose.xlu0.b32.start [1/16] %v88, 128
    %105 = vxpose.xlu0.b32.cont [2/16] %v89, 128
    %106 = vxpose.xlu0.b32.cont [3/16] %v90, 128
    %107 = vxpose.xlu0.b32.cont [4/16] %v91, 128
    %108 = vxpose.xlu0.b32.cont [5/16] %v92, 128
    %109 = vxpose.xlu0.b32.cont [6/16] %v93, 128
    %110 = vxpose.xlu0.b32.cont [7/16] %v94, 128
    %111 = vxpose.xlu0.b32.cont [8/16] %v95, 128
    %112 = vxpose.xlu0.b32.cont [9/16] %v96, 128
    %113 = vxpose.xlu0.b32.cont [10/16] %v97, 128
    %114 = vxpose.xlu0.b32.cont [11/16] %v98, 128
    %115 = vxpose.xlu0.b32.cont [12/16] %v99, 128
    %116 = vxpose.xlu0.b32.cont [13/16] %v100, 128
    %117 = vxpose.xlu0.b32.cont [14/16] %v101, 128
    %118 = vxpose.xlu0.b32.cont [15/16] %v102, 128
    %119 = vxpose.xlu0.b32.end [16/16] %v103, 128
    %v120 = vpop.trf.xlu0
    %v121 = vpop.trf.xlu0
    %v122 = vpop.trf.xlu0
    %v123 = vpop.trf.xlu0
    %v124 = vpop.trf.xlu0
    %v125 = vpop.trf.xlu0
    %v126 = vpop.trf.xlu0
    %v127 = vpop.trf.xlu0
    %v128 = vpop.trf.xlu0
    %v129 = vpop.trf.xlu0
    %v130 = vpop.trf.xlu0
    %v131 = vpop.trf.xlu0
    %v132 = vpop.trf.xlu0
    %v133 = vpop.trf.xlu0
    %v134 = vpop.trf.xlu0
    %v135 = vpop.trf.xlu0
    %s136 = scalar_lea.vmem [#allocation5], 128
    %137 = vst [vmem:[%s136] sm:$0xff] %v120
    %138 = vst [vmem:[%s136 + $0x8] sm:$0xff] %v121
    %139 = vst [vmem:[%s136 + $0x10] sm:$0xff] %v122
    %140 = vst [vmem:[%s136 + $0x18] sm:$0xff] %v123
    %141 = vst [vmem:[%s136 + $0x20] sm:$0xff] %v124
    %142 = vst [vmem:[%s136 + $0x28] sm:$0xff] %v125
    %143 = vst [vmem:[%s136 + $0x30] sm:$0xff] %v126
    %144 = vst [vmem:[%s136 + $0x38] sm:$0xff] %v127
    %145 = vst [vmem:[%s136 + $0x40] sm:$0xff] %v128
    %146 = vst [vmem:[%s136 + $0x48] sm:$0xff] %v129
    %147 = vst [vmem:[%s136 + $0x50] sm:$0xff] %v130
    %148 = vst [vmem:[%s136 + $0x58] sm:$0xff] %v131
    %149 = vst [vmem:[%s136 + $0x60] sm:$0xff] %v132
    %150 = vst [vmem:[%s136 + $0x68] sm:$0xff] %v133
    %151 = vst [vmem:[%s136 + $0x70] sm:$0xff] %v134
    %152 = vst [vmem:[%s136 + $0x78] sm:$0xff] %v135
    // Predicated region
    $region10: #{tpu_custom_call.1} parent=1 // pred_check
      _
    $region11: #{tpu_custom_call.1} parent=1 // pred_check_branch
      %154 = sbr.rel (0) target = $region13
    $region12: #{tpu_custom_call.1} parent=1 // pred_region
      %s156 = ssub.s32 4096, 4096
      %157 = vsyncadd [#allocation4], %s156
      %s158 = sshll.u32 [#allocation5], 4
      %s159 = int_to_ptr.vmem [resolvable:$true] %s158
      %164 = dma.vmem_to_hbm [thread:$0]  %s159, 4096, %s1, [#allocation4], 128, 128, 8
    $region13: #{tpu_custom_call.1} parent=1 // pred_fallthru
      _
    // Predicated region
    $region14: #{tpu_custom_call.1} parent=1 // pred_check
      _
    $region15: #{tpu_custom_call.1} parent=1 // pred_check_branch
      %166 = sbr.rel (0) target = $region17
    $region16: #{tpu_custom_call.1} parent=1 // pred_region
      %167 = dma.done [#allocation4], 4096
    $region17: #{tpu_custom_call.1} parent=1 // pred_fallthru
      _
    %168 = vsyncpa [#allocation3], 1
    %169 = vsyncpa [#allocation4], 1

</llo_original>
